<compile_context>
chip_gen: v7x
topology: tpu7x:2x2x1
jax: 0.10.0
libtpu: 0.0.40
codegen_flags: <defaults>
</compile_context>

<pallas_src>
import numpy as np
import jax
import jax.numpy as jnp
from jax.experimental import pallas as pl
from jax.experimental.pallas import tpu as pltpu

EPSILON = 1e-12
ALPHA = 1.0


def _make_kernel(alpha):
    def kernel(x_ref, scale_ref, mean_ref, o_ref):
        # x_ref:     (T_R, T_L) tile of the (N*C, H*W) slab (input dtype)
        # scale_ref: (T_R, 1) per-row 1/(eps + sqrt(std))   (row -> channel = row % C)
        # mean_ref:  (T_R, 1) per-row mean
        x = x_ref[...].astype(jnp.float32)
        z = (x - mean_ref[...]) * scale_ref[...]
        if alpha == 1.0:
            # 0.5*(1+tanh(sign(z)*log1p|z|)) == sigmoid(2*sign(z)*log1p|z|)
            #   z >= 0 : w/(w+1),   z < 0 : 1/(w+1),   w = (1+|z|)^2
            w = 1.0 + jnp.abs(z)
            w = w * w
            num = jnp.where(z >= 0.0, w, 1.0)
            out = num * pl.reciprocal(w + 1.0, approx=True)
        else:
            # General-alpha fallback (not exercised here): tanh is odd, so the
            # sign can be applied after the transcendentals with one select.
            t = jnp.tanh(alpha * jnp.log(1.0 + jnp.abs(z)))
            out = 0.5 + 0.5 * jnp.where(z >= 0.0, t, -t)
        o_ref[...] = out.astype(o_ref.dtype)

    return kernel


def _vmem_capacity_bytes():
    try:
        return int(pltpu.get_tpu_info().vmem_capacity_bytes)
    except Exception:
        pass
    try:
        kind = jax.devices()[0].device_kind.lower()
    except Exception:
        kind = ""
    if "v4" in kind or "v5" in kind or "v6" in kind:
        return 128 * 1024 * 1024
    return 64 * 1024 * 1024  # v7x / unknown: be conservative


def _budget():
    """(max_block_bytes, vmem_limit_bytes) gated per generation."""
    vmem = _vmem_capacity_bytes()
    if vmem >= 128 * 1024 * 1024:          # v4 / v5e / v6e: plenty of VMEM
        return 8 * 1024 * 1024, 64 * 1024 * 1024
    if vmem >= 64 * 1024 * 1024:           # v7x: 64 MiB per TC
        return 4 * 1024 * 1024, 40 * 1024 * 1024
    return 1 * 1024 * 1024, None           # tiny/unknown VMEM: stay small, default limit


def _choose_tiles(rows, cols, itemsize, max_block_bytes, min_steps=8):
    """Pick (t_r, t_l) for the (rows, cols) slab.

    Each block dim is either the full extent (always legal) or a multiple of
    the dtype's native sublane/lane tile; ragged extents get a masked edge
    block instead of wrapper-side padding.  Blocks stay under max_block_bytes
    so the double-buffered in+out footprint fits comfortably in VMEM.
    """
    sublane_align = 8 * max(1, 4 // itemsize)     # 8 f32 / 16 bf16 / 32 int8

    # Lane (last) axis.
    max_lanes = max(128, (max_block_bytes // (sublane_align * itemsize)) // 128 * 128)
    if cols <= max_lanes:
        t_l = cols                                # full extent, no masking
    else:
        t_l = max_lanes                           # multiple of 128; edge block masked

    # Sublane (second-to-last) axis.
    max_rows = max(sublane_align, max_block_bytes // (t_l * itemsize))
    if rows <= max_rows:
        t_r = rows                                # full extent
    else:
        t_r = (max_rows // sublane_align) * sublane_align

    # Megacore: v7x has 2 TensorCores and "parallel" only shards grid steps, so
    # avoid degenerate grids by shrinking rows first, then lanes.
    grid_r, grid_l = pl.cdiv(rows, t_r), pl.cdiv(cols, t_l)
    if grid_r * grid_l < min_steps and rows > sublane_align:
        want_r = pl.cdiv(min_steps, grid_l)
        t_r = max(sublane_align,
                  (pl.cdiv(rows, want_r) // sublane_align) * sublane_align)
        grid_r = pl.cdiv(rows, t_r)
    if grid_r * grid_l < min_steps and cols % 128 == 0 and cols > 128:
        want_l = pl.cdiv(min_steps, grid_r)
        t_l = max(128, (pl.cdiv(cols, want_l) // 128) * 128)

    return t_r, t_l


def binary_normalizer(x_nchw, mean_c, std_c, *, alpha=ALPHA, epsilon=EPSILON):
    """x_nchw: (N, C, H, W); mean_c, std_c: (C,) buffers ('std' holds the running variance)."""
    N, C, H, W = x_nchw.shape
    HW = H * W
    rows = N * C

    # Hoist the tiny per-channel work out of the kernel ((C,)-sized ops).
    disc = 1.0 / (epsilon + jnp.sqrt(std_c.astype(jnp.float32)))           # (C,)
    scale_rows = jnp.tile(disc, (N,)).reshape(rows, 1)                     # row -> c = row % C
    mean_rows = jnp.tile(mean_c.astype(jnp.float32), (N,)).reshape(rows, 1)

    # Dense 2-D view (free reshape).  No pad / no trailing slice: ragged H*W is
    # handled by full-extent lane blocks or Pallas edge masking.
    x2 = x_nchw.reshape(rows, HW)
    itemsize = int(jnp.dtype(x2.dtype).itemsize)

    max_block_bytes, vmem_limit = _budget()
    t_r, t_l = _choose_tiles(rows, HW, itemsize, max_block_bytes)
    grid = (pl.cdiv(rows, t_r), pl.cdiv(HW, t_l))

    cp_kwargs = dict(dimension_semantics=("parallel", "parallel"))
    if vmem_limit is not None:
        cp_kwargs["vmem_limit_bytes"] = vmem_limit

    out = pl.pallas_call(
        _make_kernel(alpha),
        out_shape=jax.ShapeDtypeStruct((rows, HW), x2.dtype),
        grid=grid,
        in_specs=[
            pl.BlockSpec((t_r, t_l), lambda i, j: (i, j)),
            pl.BlockSpec((t_r, 1), lambda i, j: (i, 0)),
            pl.BlockSpec((t_r, 1), lambda i, j: (i, 0)),
        ],
        out_specs=pl.BlockSpec((t_r, t_l), lambda i, j: (i, j)),
        compiler_params=pltpu.CompilerParams(**cp_kwargs),
    )(x2, scale_rows, mean_rows)

    return out.reshape(N, C, H, W)


def binary_normalizer_ref(x_nchw, mean_c, std_c, alpha=ALPHA, epsilon=EPSILON):
    x = x_nchw.astype(jnp.float32)
    mean = mean_c.astype(jnp.float32).reshape(1, -1, 1, 1)
    std = std_c.astype(jnp.float32).reshape(1, -1, 1, 1)
    disc = 1.0 / (epsilon + jnp.sqrt(std))
    z = (x - mean) * disc
    sl = jnp.sign(z) * jnp.log(1.0 + jnp.abs(z))
    return 0.5 * (1.0 + jnp.tanh(alpha * sl))


if __name__ == "__main__":
    key = jax.random.PRNGKey(0)

    # (N, C, H, W, dtype, atol/rtol).  Tolerance is set by the approximate EUP
    # reciprocal (~2^-12 relative) used in the closed-form sigmoid; outputs are
    # bounded in (0, 1).
    cases = [
        (2, 4, 16, 16, jnp.float32, 2e-3),   # aligned slab (rows=8, lanes=256)
        (2, 3, 7, 7, jnp.float32, 2e-3),     # ragged: full-extent (6, 49) block
        (3, 3, 16, 16, jnp.float32, 2e-3),   # rows=9: masked edge row-block
        (2, 4, 16, 16, jnp.bfloat16, 1e-2),  # bf16 in/out passthrough
    ]

    for N, C, H, W, dtype, tol in cases:
        key, kx, km, ks = jax.random.split(key, 4)
        x = (jax.random.normal(kx, (N, C, H, W), dtype=jnp.float32) * 3.0).astype(dtype)
        # Buffers: module __init__ uses zeros / ones; use deterministic
        # non-trivial values to exercise the compute.
        mean_c = jax.random.normal(km, (C,), dtype=jnp.float32) * 0.5
        std_c = jax.random.uniform(ks, (C,), dtype=jnp.float32,
                                   minval=0.5, maxval=2.0)

        out = binary_normalizer(x, mean_c, std_c)
        out = jax.block_until_ready(out)

        ref = binary_normalizer_ref(x, mean_c, std_c)
        np.testing.assert_allclose(
            np.asarray(jax.device_get(out)).astype(np.float32),
            np.asarray(jax.device_get(ref)).astype(np.float32),
            rtol=tol, atol=tol)

    print("KERNEL_OK")
</pallas_src>

<mosaic_0001>
module attributes {stable_mosaic.version = 11 : i64} {
  func.func @kernel(%arg0: i32, %arg1: i32, %arg2: memref<8x128xf32, #tpu.memory_space<vmem>>, %arg3: memref<8x1xf32, #tpu.memory_space<vmem>>, %arg4: memref<8x1xf32, #tpu.memory_space<vmem>>, %arg5: memref<8x128xf32, #tpu.memory_space<vmem>>) attributes {dimension_semantics = [#tpu.dimension_semantics<parallel>, #tpu.dimension_semantics<parallel>], iteration_bounds = array<i64: 1, 2>, scalar_prefetch = 0 : i64, scratch_operands = 0 : i64, tpu.core_type = #tpu.core_type<tc>, window_params = [{transform_indices = @transform_0, window_bounds = array<i64: 8, 128>}, {transform_indices = @transform_1, window_bounds = array<i64: 8, 1>}, {transform_indices = @transform_2, window_bounds = array<i64: 8, 1>}, {transform_indices = @transform_3, window_bounds = array<i64: 8, 128>}]} {
    %c0 = arith.constant 0 : index
    %c0_0 = arith.constant 0 : index
    %0 = vector.load %arg2[%c0, %c0_0] : memref<8x128xf32, #tpu.memory_space<vmem>>, vector<8x128xf32>
    %c0_1 = arith.constant 0 : index
    %c0_2 = arith.constant 0 : index
    %1 = vector.load %arg4[%c0_1, %c0_2] : memref<8x1xf32, #tpu.memory_space<vmem>>, vector<8x1xf32>
    %2 = vector.broadcast %1 : vector<8x1xf32> to vector<8x128xf32>
    %3 = arith.subf %0, %2 : vector<8x128xf32>
    %c0_3 = arith.constant 0 : index
    %c0_4 = arith.constant 0 : index
    %4 = vector.load %arg3[%c0_3, %c0_4] : memref<8x1xf32, #tpu.memory_space<vmem>>, vector<8x1xf32>
    %5 = vector.broadcast %4 : vector<8x1xf32> to vector<8x128xf32>
    %6 = arith.mulf %3, %5 : vector<8x128xf32>
    %7 = math.absf %6 : vector<8x128xf32>
    %cst = arith.constant 1.000000e+00 : f32
    %8 = vector.broadcast %cst : f32 to vector<8x128xf32>
    %9 = arith.addf %8, %7 : vector<8x128xf32>
    %10 = arith.mulf %9, %9 : vector<8x128xf32>
    %cst_5 = arith.constant 0.000000e+00 : f32
    %11 = vector.broadcast %cst_5 : f32 to vector<8x128xf32>
    %12 = arith.cmpf oge, %6, %11 : vector<8x128xf32>
    %cst_6 = arith.constant 1.000000e+00 : f32
    %13 = vector.broadcast %cst_6 : f32 to vector<8x128xf32>
    %14 = arith.select %12, %10, %13 : vector<8x128xi1>, vector<8x128xf32>
    %cst_7 = arith.constant 1.000000e+00 : f32
    %15 = vector.broadcast %cst_7 : f32 to vector<8x128xf32>
    %16 = arith.addf %10, %15 : vector<8x128xf32>
    %17 = tpu.reciprocal %16 {approx = true} : vector<8x128xf32> -> vector<8x128xf32>
    %18 = arith.mulf %14, %17 : vector<8x128xf32>
    %c0_8 = arith.constant 0 : index
    %c0_9 = arith.constant 0 : index
    %19 = vector.load %arg5[%c0_8, %c0_9] : memref<8x128xf32, #tpu.memory_space<vmem>>, vector<8x128xf32>
    tpu.vector_store %arg5[%c0_8, %c0_9], %18 {strides = array<i32>} : memref<8x128xf32, #tpu.memory_space<vmem>>, vector<8x128xf32>,
    return
  }
  func.func @transform_0(%arg0: i32, %arg1: i32) -> (i32, i32) {
    %c0_i32 = arith.constant 0 : i32
    return %arg0, %arg1 : i32, i32
  }
  func.func @transform_1(%arg0: i32, %arg1: i32) -> (i32, i32) {
    %c0_i32 = arith.constant 0 : i32
    %c0_i32_0 = arith.constant 0 : i32
    return %arg0, %c0_i32 : i32, i32
  }
  func.func @transform_2(%arg0: i32, %arg1: i32) -> (i32, i32) {
    %c0_i32 = arith.constant 0 : i32
    %c0_i32_0 = arith.constant 0 : i32
    return %arg0, %c0_i32 : i32, i32
  }
  func.func @transform_3(%arg0: i32, %arg1: i32) -> (i32, i32) {
    %c0_i32 = arith.constant 0 : i32
    return %arg0, %arg1 : i32, i32
  }
}

</mosaic_0001>

<llo_original>
// kernel: tpu_custom_call.1
$region0: #{tpu_custom_call.1}
  #allocation0 [shape = 'u32[]', space=smem, size = 0x4, offset = 0x4, fixed_abs, tag = 'smem constant byte address 0x4 - core index']
  #allocation1 [shape = 'u32[144,128]{1,0:T(1,128)}', space=vmem, size = 0x12000, scoped, tag = 'internal scratch']
  %s0 = inlined_call_operand.vmem [shape: f32[8,256], index: 0, kind: input, shape index: {}]
  %s1 = inlined_call_operand.vmem [shape: f32[8,1], index: 1, kind: input, shape index: {}]
  %s2 = inlined_call_operand.vmem [shape: f32[8,1], index: 2, kind: input, shape index: {}]
  %s3 = inlined_call_operand.hbm [shape: f32[8,256], index: 3, kind: output, shape index: {}]
  %s4 = sld [smem:[#allocation0]]
  $region45: #{tpu_custom_call.1} parent=0
    _
  %s6 = ssub.s32 1, %s4
  %s7 = scalar_select 0, %s6, %s4
  $region1: #{tpu_custom_call.1} parent=0
    #allocation2 [shape = 'u8[8192]{0}', space=vmem, size = 0x2000, scoped, tag = 'output window, operand 0']
    #allocation3 [shape = 's32[2]{0}', space=sflag, size = 0x8, scoped, tag = 'scoped memory for tpu_custom_call.1']
    %8 = vsyncpa [#allocation3], 0
    %s9 = scalar_lea.sflag [#allocation3], 1
    %10 = vsyncpa %s9, 0
    loop: start=0, step=1, limit=4
    $region2: #{tpu_custom_call.1} parent=1 // loop_pre_header
      _
    $region3: #{tpu_custom_call.1} parent=1 // loop_header
      %s12 = sphi 0, %s16
      %p13 = scmp.ge.s32.totalorder %s12, 4
      %s19 = sphi 0, %s31
      %s20 = sphi 0, %s27
      %s21 = sphi 0, %s19
      %s22 = sphi 0, %s20
      %s23 = sphi 0, %s21
      %s24 = sphi 0, %s22
      %s36 = sphi 0, %s38
      %s39 = sphi 0, %s36
      %s40 = sphi 0, %s39
      %s56 = sphi 0, %s40
      %s62 = sphi 0, %s64
      %s65 = sphi 0, %s62
      %s66 = sphi 0, %s65
      %s82 = sphi 0, %s66
      %s88 = sphi 0, %s90
      %s91 = sphi 0, %s88
      %s92 = sphi 0, %s91
      %s108 = sphi 0, %s92
      %s116 = sphi 0, %s118
      %s119 = sphi 0, %s116
      %s120 = sphi 0, %s119
      %s136 = sphi 0, %s120
    $region4: #{tpu_custom_call.1} parent=1 // loop_header_branch
      %15 = sbr.rel (%p13) target = $region8
    $region5: #{tpu_custom_call.1} parent=1 // loop_body
      %s17 = ssub.s32 %s12, 1
      %s18 = ssub.s32 %s12, 2
      %s25 = sadd.s32 1, %s20
      %p26 = scmp.ge.s32.totalorder %s25, 2
      %s27 = scalar_select %p26, 0, %s25
      %s28 = sadd.s32 1, %s19
      %s29 = scalar_select %p26, %s28, %s19
      %p30 = scmp.ge.s32.totalorder %s29, 1
      %s31 = scalar_select %p30, 0, %s29
      %s32 = ssub.s32 %s19, %s31
      %s33 = ssub.s32 %s20, %s27
      %s34 = sor.u32 %s32, %s33
      %p35 = scmp.eq.s32.totalorder %s34, 0
      %s37 = sadd.s32 %s36, 1
      %s38 = scalar_select %p35, %s36, %s37
      %p41 = pneg %p35
      %p42 = scmp.eq.s32.totalorder %s12, 1
      %p43 = por %p41, %p42
      %p44 = scmp.ne.s32.totalorder %s36, %s39
      %p45 = scmp.eq.s32.totalorder %s12, 0
      %p46 = por %p44, %p45
      %p47 = scmp.ne.s32.totalorder %s36, %s39
      %p48 = scmp.eq.s32.totalorder %s17, 1
      %p49 = por %p47, %p48
      %p50 = scmp.ne.s32.totalorder %s39, %s40
      %p51 = scmp.eq.s32.totalorder %s17, 0
      %p52 = por %p50, %p51
      %p53 = scmp.ne.s32.totalorder %s39, %s40
      %p54 = scmp.eq.s32.totalorder %s18, 1
      %p55 = por %p53, %p54
      %p57 = scmp.ne.s32.totalorder %s40, %s56
      %p58 = scmp.eq.s32.totalorder %s18, 0
      %p59 = por %p57, %p58
      %s60 = ssub.s32 %s19, %s31
      %p61 = scmp.eq.s32.totalorder %s60, 0
      %s63 = sadd.s32 %s62, 1
      %s64 = scalar_select %p61, %s62, %s63
      %p67 = pneg %p61
      %p68 = scmp.eq.s32.totalorder %s12, 1
      %p69 = por %p67, %p68
      %p70 = scmp.ne.s32.totalorder %s62, %s65
      %p71 = scmp.eq.s32.totalorder %s12, 0
      %p72 = por %p70, %p71
      %p73 = scmp.ne.s32.totalorder %s62, %s65
      %p74 = scmp.eq.s32.totalorder %s17, 1
      %p75 = por %p73, %p74
      %p76 = scmp.ne.s32.totalorder %s65, %s66
      %p77 = scmp.eq.s32.totalorder %s17, 0
      %p78 = por %p76, %p77
      %p79 = scmp.ne.s32.totalorder %s65, %s66
      %p80 = scmp.eq.s32.totalorder %s18, 1
      %p81 = por %p79, %p80
      %p83 = scmp.ne.s32.totalorder %s66, %s82
      %p84 = scmp.eq.s32.totalorder %s18, 0
      %p85 = por %p83, %p84
      %s86 = ssub.s32 %s19, %s31
      %p87 = scmp.eq.s32.totalorder %s86, 0
      %s89 = sadd.s32 %s88, 1
      %s90 = scalar_select %p87, %s88, %s89
      %p93 = pneg %p87
      %p94 = scmp.eq.s32.totalorder %s12, 1
      %p95 = por %p93, %p94
      %p96 = scmp.ne.s32.totalorder %s88, %s91
      %p97 = scmp.eq.s32.totalorder %s12, 0
      %p98 = por %p96, %p97
      %p99 = scmp.ne.s32.totalorder %s88, %s91
      %p100 = scmp.eq.s32.totalorder %s17, 1
      %p101 = por %p99, %p100
      %p102 = scmp.ne.s32.totalorder %s91, %s92
      %p103 = scmp.eq.s32.totalorder %s17, 0
      %p104 = por %p102, %p103
      %p105 = scmp.ne.s32.totalorder %s91, %s92
      %p106 = scmp.eq.s32.totalorder %s18, 1
      %p107 = por %p105, %p106
      %p109 = scmp.ne.s32.totalorder %s92, %s108
      %p110 = scmp.eq.s32.totalorder %s18, 0
      %p111 = por %p109, %p110
      %s112 = ssub.s32 %s19, %s31
      %s113 = ssub.s32 %s20, %s27
      %s114 = sor.u32 %s112, %s113
      %p115 = scmp.eq.s32.totalorder %s114, 0
      %s117 = sadd.s32 %s116, 1
      %s118 = scalar_select %p115, %s116, %s117
      %p121 = pneg %p115
      %p122 = scmp.eq.s32.totalorder %s12, 1
      %p123 = por %p121, %p122
      %p124 = scmp.ne.s32.totalorder %s116, %s119
      %p125 = scmp.eq.s32.totalorder %s12, 0
      %p126 = por %p124, %p125
      %p127 = scmp.ne.s32.totalorder %s116, %s119
      %p128 = scmp.eq.s32.totalorder %s17, 1
      %p129 = por %p127, %p128
      %p130 = scmp.ne.s32.totalorder %s119, %s120
      %p131 = scmp.eq.s32.totalorder %s17, 0
      %p132 = por %p130, %p131
      %p133 = scmp.ne.s32.totalorder %s119, %s120
      %p134 = scmp.eq.s32.totalorder %s18, 1
      %p135 = por %p133, %p134
      %p137 = scmp.ne.s32.totalorder %s120, %s136
      %p138 = scmp.eq.s32.totalorder %s18, 0
      %p139 = por %p137, %p138
      %p140 = scmp.le.s32.totalorder 1, %s12
      %p141 = scmp.lt.s32.totalorder %s12, 3
      %p142 = pnand %p140, %p141
      %p143 = pneg %p142
      // Predicated region
      $region9: #{tpu_custom_call.1} parent=5 // pred_check
        _
      $region10: #{tpu_custom_call.1} parent=5 // pred_check_branch
        %145 = sbr.rel (%p142) target = $region12
      $region11: #{tpu_custom_call.1} parent=5 // pred_region
        %s146 = ssub.s32 %s12, 1
        // Predicated region
        $region13: #{tpu_custom_call.1} parent=11 // pred_check
          %p147 = pneg %p78
        $region14: #{tpu_custom_call.1} parent=11 // pred_check_branch
          %149 = sbr.rel (%p147) target = $region16
        $region15: #{tpu_custom_call.1} parent=11 // pred_region
          %p150 = scmp.lt.s32.totalorder %s21, 0
          %s151 = scalar_select %p150, %s21, 0
          %s152 = smul.addr %s151, 8
          %s153 = scalar_lea.vmem %s1, %s152
        $region16: #{tpu_custom_call.1} parent=11 // pred_fallthru
          _
        // Predicated region
        $region17: #{tpu_custom_call.1} parent=11 // pred_check
          %p154 = pneg %p104
        $region18: #{tpu_custom_call.1} parent=11 // pred_check_branch
          %156 = sbr.rel (%p154) target = $region20
        $region19: #{tpu_custom_call.1} parent=11 // pred_region
          %p157 = scmp.lt.s32.totalorder %s21, 0
          %s158 = scalar_select %p157, %s21, 0
          %s159 = smul.addr %s158, 8
          %s160 = scalar_lea.vmem %s2, %s159
        $region20: #{tpu_custom_call.1} parent=11 // pred_fallthru
          _
      $region12: #{tpu_custom_call.1} parent=5 // pred_fallthru
        _
      %p161 = scmp.lt.s32.totalorder %s12, 2
      // Predicated region
      $region21: #{tpu_custom_call.1} parent=5 // pred_check
        %p162 = pneg %p161
      $region22: #{tpu_custom_call.1} parent=5 // pred_check_branch
        %164 = sbr.rel (%p162) target = $region24
      $region23: #{tpu_custom_call.1} parent=5 // pred_region
        // Predicated region
        $region25: #{tpu_custom_call.1} parent=23 // pred_check
          %p165 = pneg %p46
        $region26: #{tpu_custom_call.1} parent=23 // pred_check_branch
          %167 = sbr.rel (%p165) target = $region28
        $region27: #{tpu_custom_call.1} parent=23 // pred_region
          %p168 = scmp.lt.s32.totalorder %s19, 0
          %s169 = scalar_select %p168, %s19, 0
          %p170 = scmp.lt.s32.totalorder %s20, 1
          %s171 = scalar_select %p170, %s20, 1
          %s172 = smul.addr %s169, 2
          %s173 = sadd.s32 %s171, %s172
          %s174 = smul.addr %s173, 8
          %s175 = scalar_lea.vmem %s0, %s174
        $region28: #{tpu_custom_call.1} parent=23 // pred_fallthru
          _
      $region24: #{tpu_custom_call.1} parent=5 // pred_fallthru
        _
      %p176 = scmp.le.s32.totalorder 1, %s12
      %p177 = scmp.lt.s32.totalorder %s12, 3
      %p178 = pnand %p176, %p177
      %p179 = pneg %p178
      // Predicated region
      $region29: #{tpu_custom_call.1} parent=5 // pred_check
        _
      $region30: #{tpu_custom_call.1} parent=5 // pred_check_branch
        %181 = sbr.rel (%p178) target = $region32
      $region31: #{tpu_custom_call.1} parent=5 // pred_region
        %s182 = ssub.s32 %s12, 1
        %p183 = scmp.lt.s32.totalorder %s21, 0
        %s184 = scalar_select %p183, %s21, 0
        %p185 = scmp.lt.s32.totalorder %s22, 1
        %s186 = scalar_select %p185, %s22, 1
        %s187 = smul.addr %s184, 2
        %s188 = sadd.s32 %s186, %s187
        %s189 = smul.addr %s188, 8
        %s190 = scalar_lea.vmem %s0, %s189
        %p191 = pneg %p52
        %p192 = pneg %p49
        %p193 = scmp.lt.s32.totalorder %s21, 0
        %s194 = scalar_select %p193, %s21, 0
        %s195 = smul.addr %s194, 8
        %s196 = scalar_lea.vmem %s1, %s195
        %p197 = pneg %p78
        %p198 = pneg %p75
        %p199 = scmp.lt.s32.totalorder %s21, 0
        %s200 = scalar_select %p199, %s21, 0
        %s201 = smul.addr %s200, 8
        %s202 = scalar_lea.vmem %s2, %s201
        %p203 = pneg %p104
        %p204 = pneg %p101
        %p205 = pneg %p132
        %p206 = pneg %p129
        %s207 = sand.u32 %s119, 1
        %s208 = scalar_lea.sflag [#allocation3], %s207
        %s209 = sand.u32 %s119, 1
        %s210 = smul.addr %s209, 8
        %s211 = scalar_lea.vmem [#allocation2], %s210
        %p212 = scmp.lt.s32.totalorder %s21, 0
        %s213 = scalar_select %p212, %s21, 0
        %p214 = scmp.lt.s32.totalorder %s22, 1
        %s215 = scalar_select %p214, %s22, 1
        %s216 = smul.addr %s213, 2
        %s217 = sadd.s32 %s215, %s216
        %s218 = smul.addr %s217, 8
        %s219 = scalar_lea.vmem %s0, %s218
        %p220 = scmp.lt.s32.totalorder %s21, 0
        %s221 = scalar_select %p220, %s21, 0
        %s222 = smul.addr %s221, 8
        %s223 = scalar_lea.vmem %s1, %s222
        %p224 = scmp.lt.s32.totalorder %s21, 0
        %s225 = scalar_select %p224, %s21, 0
        %s226 = smul.addr %s225, 8
        %s227 = scalar_lea.vmem %s2, %s226
        %v228 = vld [vmem:[%s219] sm:$0xff]
        %v229 = vld [vmem:[%s227] sm:$0xff]
        %231 = vset.pattern.permute.xlu0 0
        %232 = vperm.xlu0 %231, %v229
        %v233 = vpop.permute.xlu0 %232
        %v235 = vsub.f32 %v228, %v233
        %v236 = vld [vmem:[%s223] sm:$0xff]
        %238 = vset.pattern.permute.xlu0 0
        %239 = vperm.xlu0 %238, %v236
        %v240 = vpop.permute.xlu0 %239
        %v242 = vmul.f32 %v235, %v240
        %v243 = vand.u32 2147483647, %v242
        %v244 = vadd.f32 %v243, 1.0
        %v245 = vmul.f32 %v244, %v244
        %vm246 = vcmp.ge.f32.partialorder %v242, 0.0
        %v247 = vsel %vm246, %v245, 1.0
        %v248 = vadd.f32 %v245, 1.0
        %v249 = vrcp.pop %v248
        %v250 = vmul.f32 %v247, %v249
        %251 = vst [vmem:[%s211] sm:$0xff] %v250
        %s252 = sand.u32 %s119, 1
        %s253 = scalar_lea.sflag [#allocation3], %s252
        %s254 = sand.u32 %s119, 1
        %s255 = smul.addr %s254, 8
        %s256 = scalar_lea.vmem [#allocation2], %s255
        // Predicated region
        $region33: #{tpu_custom_call.1} parent=31 // pred_check
          %p257 = pneg %p129
        $region34: #{tpu_custom_call.1} parent=31 // pred_check_branch
          %259 = sbr.rel (%p257) target = $region36
        $region35: #{tpu_custom_call.1} parent=31 // pred_region
          %s261 = ssub.s32 128, 128
          %262 = vsyncadd %s253, %s261
          %s263 = smul.addr %s21, 2
          %s264 = sadd.s32 %s22, %s263
          %s265 = smul.addr %s264, 128
          %s266 = scalar_lea.hbm %s3, %s265
          %s268 = sshll.u32 %s256, 4
          %s269 = int_to_ptr.vmem [resolvable:$true] %s268
          %271 = dma.vmem_to_hbm [thread:$0]  %s269, 128, %s266, %s253
        $region36: #{tpu_custom_call.1} parent=31 // pred_fallthru
          _
      $region32: #{tpu_custom_call.1} parent=5 // pred_fallthru
        _
      %p272 = scmp.le.s32.totalorder 2, %s12
      // Predicated region
      $region37: #{tpu_custom_call.1} parent=5 // pred_check
        %p273 = pneg %p272
      $region38: #{tpu_custom_call.1} parent=5 // pred_check_branch
        %275 = sbr.rel (%p273) target = $region40
      $region39: #{tpu_custom_call.1} parent=5 // pred_region
        %s276 = ssub.s32 %s12, 2
        // Predicated region
        $region41: #{tpu_custom_call.1} parent=39 // pred_check
          %p277 = pneg %p135
        $region42: #{tpu_custom_call.1} parent=39 // pred_check_branch
          %279 = sbr.rel (%p277) target = $region44
        $region43: #{tpu_custom_call.1} parent=39 // pred_region
          %s280 = sand.u32 %s120, 1
          %s281 = scalar_lea.sflag [#allocation3], %s280
          %s282 = sand.u32 %s120, 1
          %s283 = smul.addr %s282, 8
          %s284 = scalar_lea.vmem [#allocation2], %s283
          %285 = dma.done %s281, 128
        $region44: #{tpu_custom_call.1} parent=39 // pred_fallthru
          _
      $region40: #{tpu_custom_call.1} parent=5 // pred_fallthru
        _
    $region6: #{tpu_custom_call.1} parent=1 // loop_footer
      %s16 = sadd.s32 1, %s12
    $region7: #{tpu_custom_call.1} parent=1 // loop_footer_branch
      %11 = sbr.rel target = $region3
    $region8: #{tpu_custom_call.1} parent=1 // loop_exit
      _
    %286 = vsyncpa [#allocation3], 1
    %s287 = scalar_lea.sflag [#allocation3], 1
    %288 = vsyncpa %s287, 1

</llo_original>
